<compile_context>
chip_gen: v6e
topology: v6e:2x2x1
jax: 0.10.0
libtpu: 0.0.40
codegen_flags: <defaults>
</compile_context>

<pallas_src>
import functools

import jax
import jax.numpy as jnp
from jax import lax
from jax.experimental import pallas as pl
from jax.experimental.pallas import tpu as pltpu

_EPS = 1e-8          # torch.nn.functional.cosine_similarity default eps
_EPS2 = _EPS * _EPS  # clamp on the *squared* norms (equivalent to clamping the norm)

# Conservative double-buffered-tile budget that fits v7x's 32 MiB scoped VMEM
# with headroom (and is far below v5e/v6e capacity).
_VMEM_TILE_BUDGET = 24 * 1024 * 1024
_VMEM_LIMIT_BYTES = 32 * 1024 * 1024


def _zloss_kernel(z_ref, out_ref, acc_ref, *, inv_b):
    """z_ref: (2, tb, D) block; out_ref: (1, 1) f32; acc_ref: (1, 1) f32 scratch."""
    i = pl.program_id(1)

    @pl.when(i == 0)
    def _():
        acc_ref[...] = jnp.zeros_like(acc_ref)

    # Accumulate in f32 regardless of input dtype (bf16 stays bf16 on the DMA).
    z1 = z_ref[0].astype(jnp.float32)  # (tb, D)
    z2 = z_ref[1].astype(jnp.float32)  # (tb, D)

    dot = jnp.sum(z1 * z2, axis=1, keepdims=True)  # (tb, 1)
    s1 = jnp.sum(z1 * z1, axis=1, keepdims=True)   # (tb, 1) squared norm
    s2 = jnp.sum(z2 * z2, axis=1, keepdims=True)   # (tb, 1) squared norm

    # dot / (max(||a||,eps)*max(||b||,eps)) == dot * rsqrt(max(s1,eps^2)) * rsqrt(max(s2,eps^2))
    sim = dot * lax.rsqrt(jnp.maximum(s1, _EPS2)) * lax.rsqrt(jnp.maximum(s2, _EPS2))

    # Zero-padded rows contribute exactly 0 (dot == 0), so a plain sum is safe.
    acc_ref[...] += jnp.sum(sim).reshape(1, 1)

    @pl.when(i == pl.num_programs(1) - 1)
    def _():
        out_ref[...] = acc_ref[...] * inv_b


def z_loss(z, *, tile_rows=None):
    """Returns (-z_sim, z_sim_detached), matching Z_loss.forward."""
    n, d = z.shape
    assert n % 2 == 0, "leading dim must be even (chunk(2, dim=0))"
    b = n // 2
    itemsize = jnp.dtype(z.dtype).itemsize
    sub = 16 if jnp.dtype(z.dtype) == jnp.dtype(jnp.bfloat16) else 8

    # Free, contiguous view: zr[0] == z[:b], zr[1] == z[b:].  No slice copies.
    zr = z.reshape(2, b, d)

    # --- pick a row-tile size that keeps the double-buffered block in budget ---
    if tile_rows is None:
        max_tb = _VMEM_TILE_BUDGET // (2 * 2 * d * itemsize)  # 2 halves x 2 pipeline bufs
        tile_rows = int(min(b, max(sub, max_tb)))
    tile_rows = int(min(tile_rows, b))
    if tile_rows < b:  # only constrained when actually tiling
        tile_rows = max(sub, (tile_rows // sub) * sub)

    num_tiles = pl.cdiv(b, tile_rows)

    # Leading "parallel" axis: lets v7x split the reduction across its 2 TCs;
    # on v5e/v6e (1 TC) it is just a trivially short serial outer loop.
    core_split = 2 if num_tiles >= 2 else 1
    tiles_per_part = pl.cdiv(num_tiles, core_split)
    b_pad = core_split * tiles_per_part * tile_rows
    if b_pad != b:
        # Zero rows contribute 0 to the similarity sum; divisor stays the true B.
        zr = jnp.pad(zr, ((0, 0), (0, b_pad - b), (0, 0)))

    kernel = functools.partial(_zloss_kernel, inv_b=1.0 / b)

    partials = pl.pallas_call(
        kernel,
        out_shape=jax.ShapeDtypeStruct((core_split, 1), jnp.float32),
        grid_spec=pltpu.PrefetchScalarGridSpec(
            num_scalar_prefetch=0,
            grid=(core_split, tiles_per_part),
            in_specs=[
                pl.BlockSpec(
                    (2, tile_rows, d),
                    lambda c, i: (0, c * tiles_per_part + i, 0),
                ),
            ],
            out_specs=pl.BlockSpec((1, 1), lambda c, i: (c, 0)),
            scratch_shapes=[pltpu.VMEM((1, 1), jnp.float32)],
        ),
        compiler_params=pltpu.CompilerParams(
            dimension_semantics=("parallel", "arbitrary"),
            vmem_limit_bytes=_VMEM_LIMIT_BYTES,
        ),
        cost_estimate=pl.CostEstimate(
            flops=6 * b_pad * d,
            transcendentals=2 * b_pad,
            bytes_accessed=2 * b_pad * d * itemsize + 4 * core_split,
        ),
    )(zr)

    z_sim = jnp.sum(partials).astype(z.dtype)
    # .clone().detach() -> numerically identical, just cut from autodiff graph.
    z_sim_out = lax.stop_gradient(z_sim)
    return -z_sim, z_sim_out


def _reference(z):
    """Pure-JAX reference of the same formula (f32)."""
    b = z.shape[0] // 2
    z1 = z[:b].astype(jnp.float32)
    z2 = z[b:].astype(jnp.float32)
    dot = jnp.sum(z1 * z2, axis=1)
    n1 = jnp.sqrt(jnp.sum(z1 * z1, axis=1))
    n2 = jnp.sqrt(jnp.sum(z2 * z2, axis=1))
    return jnp.mean(dot / (jnp.maximum(n1, _EPS) * jnp.maximum(n2, _EPS)))


if __name__ == "__main__":
    k1, k2 = jax.random.split(jax.random.PRNGKey(0))

    # Case 1: tiny single-tile path. N = 8 rows (two chunks of 4), D = 32.
    z = jax.random.normal(k1, (8, 32), dtype=jnp.float32)
    neg_sim, sim_out = z_loss(z)
    jax.block_until_ready((neg_sim, sim_out))
    ref = _reference(z)
    assert jnp.allclose(sim_out, ref, atol=1e-5), (sim_out, ref)
    assert jnp.allclose(neg_sim, -ref, atol=1e-5), (neg_sim, ref)

    # Case 2: exercises the tiled accumulator path + 2-way split + row padding.
    z_big = jax.random.normal(k2, (40, 128), dtype=jnp.float32)  # B = 20 pairs
    neg2, sim2 = z_loss(z_big, tile_rows=8)
    jax.block_until_ready((neg2, sim2))
    ref2 = _reference(z_big)
    assert jnp.allclose(sim2, ref2, atol=1e-5), (sim2, ref2)
    assert jnp.allclose(neg2, -ref2, atol=1e-5), (neg2, ref2)

    print("KERNEL_OK")
</pallas_src>

<mosaic_0001>
module attributes {stable_mosaic.version = 11 : i64} {
  func.func @_zloss_kernel(%arg0: i32, %arg1: i32, %arg2: memref<2x4x32xf32, #tpu.memory_space<vmem>>, %arg3: memref<1x1xf32, #tpu.memory_space<vmem>>, %arg4: memref<1x1xf32, #tpu.memory_space<vmem>>) attributes {dimension_semantics = [#tpu.dimension_semantics<parallel>, #tpu.dimension_semantics<arbitrary>], iteration_bounds = array<i64: 1, 1>, scalar_prefetch = 0 : i64, scratch_operands = 1 : i64, tpu.core_type = #tpu.core_type<tc>, window_params = [{transform_indices = @transform_0, window_bounds = array<i64: 2, 4, 32>}, {transform_indices = @transform_1, window_bounds = array<i64: 1, 1>}]} {
    %c0_i32 = arith.constant 0 : i32
    %0 = arith.cmpi eq, %arg1, %c0_i32 : i32
    %1 = arith.extui %0 : i1 to i32
    %c0_i32_0 = arith.constant 0 : i32
    %2 = arith.cmpi ne, %1, %c0_i32_0 : i32
    scf.if %2 {
      %cst_16 = arith.constant 0.000000e+00 : f32
      %35 = vector.broadcast %cst_16 : f32 to vector<1x1xf32>
      %c0_17 = arith.constant 0 : index
      %c0_18 = arith.constant 0 : index
      %36 = vector.load %arg4[%c0_17, %c0_18] : memref<1x1xf32, #tpu.memory_space<vmem>>, vector<1x1xf32>
      tpu.vector_store %arg4[%c0_17, %c0_18], %35 {strides = array<i32>} : memref<1x1xf32, #tpu.memory_space<vmem>>, vector<1x1xf32>,
    } else {
    }
    %c0 = arith.constant 0 : index
    %c0_1 = arith.constant 0 : index
    %c0_2 = arith.constant 0 : index
    %3 = vector.load %arg2[%c0, %c0_1, %c0_2] : memref<2x4x32xf32, #tpu.memory_space<vmem>>, vector<1x4x32xf32>
    %4 = vector.shape_cast %3 : vector<1x4x32xf32> to vector<4x32xf32>
    %c1 = arith.constant 1 : index
    %c0_3 = arith.constant 0 : index
    %c0_4 = arith.constant 0 : index
    %5 = vector.load %arg2[%c1, %c0_3, %c0_4] : memref<2x4x32xf32, #tpu.memory_space<vmem>>, vector<1x4x32xf32>
    %6 = vector.shape_cast %5 : vector<1x4x32xf32> to vector<4x32xf32>
    %7 = arith.mulf %4, %6 : vector<4x32xf32>
    %cst = arith.constant dense<0.000000e+00> : vector<4xf32>
    %8 = vector.multi_reduction <add>, %7, %cst [1] : vector<4x32xf32> to vector<4xf32>
    %9 = vector.shape_cast %8 : vector<4xf32> to vector<4x1xf32>
    %10 = arith.mulf %4, %4 : vector<4x32xf32>
    %cst_5 = arith.constant dense<0.000000e+00> : vector<4xf32>
    %11 = vector.multi_reduction <add>, %10, %cst_5 [1] : vector<4x32xf32> to vector<4xf32>
    %12 = vector.shape_cast %11 : vector<4xf32> to vector<4x1xf32>
    %13 = arith.mulf %6, %6 : vector<4x32xf32>
    %cst_6 = arith.constant dense<0.000000e+00> : vector<4xf32>
    %14 = vector.multi_reduction <add>, %13, %cst_6 [1] : vector<4x32xf32> to vector<4xf32>
    %15 = vector.shape_cast %14 : vector<4xf32> to vector<4x1xf32>
    %cst_7 = arith.constant 1.000000e-16 : f32
    %16 = vector.broadcast %cst_7 : f32 to vector<4x1xf32>
    %17 = arith.maximumf %12, %16 : vector<4x1xf32>
    %18 = math.rsqrt %17 : vector<4x1xf32>
    %19 = arith.mulf %9, %18 : vector<4x1xf32>
    %cst_8 = arith.constant 1.000000e-16 : f32
    %20 = vector.broadcast %cst_8 : f32 to vector<4x1xf32>
    %21 = arith.maximumf %15, %20 : vector<4x1xf32>
    %22 = math.rsqrt %21 : vector<4x1xf32>
    %23 = arith.mulf %19, %22 : vector<4x1xf32>
    %c0_9 = arith.constant 0 : index
    %c0_10 = arith.constant 0 : index
    %24 = vector.load %arg4[%c0_9, %c0_10] : memref<1x1xf32, #tpu.memory_space<vmem>>, vector<1x1xf32>
    %25 = vector.shape_cast %23 : vector<4x1xf32> to vector<1x4x1xf32>
    %cst_11 = arith.constant dense<0.000000e+00> : vector<1xf32>
    %26 = vector.multi_reduction <add>, %25, %cst_11 [1, 2] : vector<1x4x1xf32> to vector<1xf32>
    %27 = vector.shape_cast %26 : vector<1xf32> to vector<1x1x1xf32>
    %28 = vector.extract %27[0, 0, 0] : f32 from vector<1x1x1xf32>
    %29 = vector.broadcast %28 : f32 to vector<1x1xf32>
    %30 = arith.addf %24, %29 : vector<1x1xf32>
    %c0_12 = arith.constant 0 : index
    %c0_13 = arith.constant 0 : index
    %31 = vector.load %arg4[%c0_12, %c0_13] : memref<1x1xf32, #tpu.memory_space<vmem>>, vector<1x1xf32>
    tpu.vector_store %arg4[%c0_12, %c0_13], %30 {strides = array<i32>} : memref<1x1xf32, #tpu.memory_space<vmem>>, vector<1x1xf32>,
    %c0_i32_14 = arith.constant 0 : i32
    %32 = arith.cmpi eq, %arg1, %c0_i32_14 : i32
    %33 = arith.extui %32 : i1 to i32
    %c0_i32_15 = arith.constant 0 : i32
    %34 = arith.cmpi ne, %33, %c0_i32_15 : i32
    scf.if %34 {
      %c0_16 = arith.constant 0 : index
      %c0_17 = arith.constant 0 : index
      %35 = vector.load %arg4[%c0_16, %c0_17] : memref<1x1xf32, #tpu.memory_space<vmem>>, vector<1x1xf32>
      %cst_18 = arith.constant 2.500000e-01 : f32
      %36 = vector.broadcast %cst_18 : f32 to vector<1x1xf32>
      %37 = arith.mulf %35, %36 : vector<1x1xf32>
      %c0_19 = arith.constant 0 : index
      %c0_20 = arith.constant 0 : index
      %38 = vector.load %arg3[%c0_19, %c0_20] : memref<1x1xf32, #tpu.memory_space<vmem>>, vector<1x1xf32>
      tpu.vector_store %arg3[%c0_19, %c0_20], %37 {strides = array<i32>} : memref<1x1xf32, #tpu.memory_space<vmem>>, vector<1x1xf32>,
    } else {
    }
    return
  }
  func.func @transform_0(%arg0: i32, %arg1: i32) -> (i32, i32, i32) {
    %c1_i32 = arith.constant 1 : i32
    %0 = arith.muli %arg0, %c1_i32 : i32
    %1 = arith.addi %0, %arg1 : i32
    %c0_i32 = arith.constant 0 : i32
    %c0_i32_0 = arith.constant 0 : i32
    %c0_i32_1 = arith.constant 0 : i32
    return %c0_i32, %1, %c0_i32_0 : i32, i32, i32
  }
  func.func @transform_1(%arg0: i32, %arg1: i32) -> (i32, i32) {
    %c0_i32 = arith.constant 0 : i32
    %c0_i32_0 = arith.constant 0 : i32
    return %arg0, %c0_i32 : i32, i32
  }
}

</mosaic_0001>

<llo_original>
// kernel: tpu_custom_call.1
$region0: #{tpu_custom_call.1}
  #allocation0 [shape = 'u32[]', space=smem, size = 0x4, offset = 0x4, fixed_abs, tag = 'smem constant byte address 0x4 - core index']
  #allocation1 [shape = 'u32[144,128]{1,0:T(1,128)}', space=vmem, size = 0x12000, scoped, tag = 'internal scratch']
  #allocation2 [shape = 'f32[1,1]{1,0:T(1,128)}', space=vmem, size = 0x200, scoped, tag = 'scratch operand']
  %s0 = inlined_call_operand.hbm [shape: f32[2,4,32], index: 0, kind: input, shape index: {}]
  %s1 = inlined_call_operand.hbm [shape: f32[1,1], index: 1, kind: output, shape index: {}]
  %s2 = sld [smem:[#allocation0]]
  $region26: #{tpu_custom_call.1} parent=0
    _
  %s4 = ssub.s32 1, %s2
  %s5 = scalar_select 0, %s4, %s2
  $region1: #{tpu_custom_call.1} parent=0
    #allocation3 [shape = 'u8[4096]{0}', space=vmem, size = 0x1000, scoped, tag = 'input window, operand 0, single buffered']
    #allocation4 [shape = 's32[1]{0}', space=sflag, size = 0x4, scoped, tag = 'scoped memory for tpu_custom_call.1']
    #allocation5 [shape = 's32[1]{0}', space=sflag, size = 0x4, scoped, tag = 'scoped memory for tpu_custom_call.1']
    #allocation6 [shape = 'u8[512]{0}', space=vmem, size = 0x400, scoped, tag = 'output window, operand 0, single buffered']
    %6 = vsyncpa [#allocation4], 0
    %7 = vsyncpa [#allocation5], 0
    // Predicated region
    $region2: #{tpu_custom_call.1} parent=1 // pred_check
      _
    $region3: #{tpu_custom_call.1} parent=1 // pred_check_branch
      %9 = sbr.rel (0) target = $region5
    $region4: #{tpu_custom_call.1} parent=1 // pred_region
      %s10 = sadd.s32 0, 0
      %s12 = ssub.s32 128, 128
      %13 = vsyncadd [#allocation4], %s12
      %s14 = smul.addr %s10, 64
      %s15 = scalar_lea.hbm %s0, %s14
      %s16 = sshll.u32 [#allocation3], 4
      %s17 = int_to_ptr.vmem [resolvable:$true] %s16
      %22 = dma.hbm_to_vmem [thread:$0]  %s15, 128, %s17, [#allocation4], 64, 64, 4
    $region5: #{tpu_custom_call.1} parent=1 // pred_fallthru
      _
    // Predicated region
    $region6: #{tpu_custom_call.1} parent=1 // pred_check
      _
    $region7: #{tpu_custom_call.1} parent=1 // pred_check_branch
      %24 = sbr.rel (0) target = $region9
    $region8: #{tpu_custom_call.1} parent=1 // pred_region
      %25 = dma.done [#allocation4], 128
    $region9: #{tpu_custom_call.1} parent=1 // pred_fallthru
      _
    %s26 = sadd.s32 0, 0
    %p27 = scmp.eq.s32.totalorder 0, 0
    // Predicated region
    $region10: #{tpu_custom_call.1} parent=1 // pred_check
      %p28 = pneg %p27
    $region11: #{tpu_custom_call.1} parent=1 // pred_check_branch
      %30 = sbr.rel (%p28) target = $region13
    $region12: #{tpu_custom_call.1} parent=1 // pred_region
      %vm31 = vcmask 0
      %32 = vst.msk [vmem:[#allocation2] sm:$0x1] %vm31, 0.0
    $region13: #{tpu_custom_call.1} parent=1 // pred_fallthru
      _
    %v33 = vld [vmem:[#allocation3] sm:$0xf]
    %s34 = scalar_lea.vmem [#allocation3], 4
    %v35 = vld [vmem:[%s34] sm:$0xf]
    %v36 = vmul.f32 %v33, %v35
    %vm37 = vcmask 257024
    %v38 = vsel %vm37, %v36, 0.0
    %39 = vadd.xlane.f32.xlu0 %v38
    %v40 = vpop.xlane.xlu0 %39
    %v41 = vmul.f32 %v33, %v33
    %v42 = vsel %vm37, %v41, 0.0
    %43 = vadd.xlane.f32.xlu0 %v42
    %v44 = vpop.xlane.xlu0 %43
    %v45 = vmul.f32 %v35, %v35
    %v46 = vsel %vm37, %v45, 0.0
    %47 = vadd.xlane.f32.xlu0 %v46
    %v48 = vpop.xlane.xlu0 %47
    %v49 = vmax.f32 %v44, 1e-16
    %v50 = vrsqrt.pop %v49
    %v51 = vmul.f32 %v40, %v50
    %v52 = vmax.f32 %v48, 1e-16
    %v53 = vrsqrt.pop %v52
    %v54 = vmul.f32 %v51, %v53
    %v55 = vld [vmem:[#allocation2] sm:$0x1]
    %vm56 = vcmask 3072
    %v57 = vsel %vm56, %v54, 0.0
    %58 = vadd.xlane.f32.xlu0 %v57
    %v59 = vpop.xlane.xlu0 %58
    %v60 = vrot.slane %v59, 4
    %v61 = vadd.f32 %v59, %v60
    %v62 = vrot.slane %v61, 2
    %v63 = vadd.f32 %v61, %v62
    %v64 = vrot.slane %v63, 1
    %v65 = vadd.f32 %v63, %v64
    %s66 = vtos %v65
    %v67 = vstv %s66
    %v68 = vadd.f32 %v55, %v67
    %vm69 = vcmask 0
    %70 = vst.msk [vmem:[#allocation2] sm:$0x1] %vm69, %v68
    // Predicated region
    $region14: #{tpu_custom_call.1} parent=1 // pred_check
      %p71 = pneg %p27
    $region15: #{tpu_custom_call.1} parent=1 // pred_check_branch
      %73 = sbr.rel (%p71) target = $region17
    $region16: #{tpu_custom_call.1} parent=1 // pred_region
      %v74 = vld [vmem:[#allocation2] sm:$0x1]
      %v75 = vmul.f32 %v74, 0.25
      %76 = vst.msk [vmem:[#allocation6] sm:$0x1] %vm69, %v75
    $region17: #{tpu_custom_call.1} parent=1 // pred_fallthru
      _
    // Predicated region
    $region18: #{tpu_custom_call.1} parent=1 // pred_check
      _
    $region19: #{tpu_custom_call.1} parent=1 // pred_check_branch
      %78 = sbr.rel (0) target = $region21
    $region20: #{tpu_custom_call.1} parent=1 // pred_region
      %s80 = ssub.s32 16, 16
      %81 = vsyncadd [#allocation5], %s80
      %s83 = sshll.u32 [#allocation6], 4
      %s84 = int_to_ptr.vmem [resolvable:$true] %s83
      %86 = dma.vmem_to_hbm [thread:$0]  %s84, 16, %s1, [#allocation5]
    $region21: #{tpu_custom_call.1} parent=1 // pred_fallthru
      _
    // Predicated region
    $region22: #{tpu_custom_call.1} parent=1 // pred_check
      _
    $region23: #{tpu_custom_call.1} parent=1 // pred_check_branch
      %88 = sbr.rel (0) target = $region25
    $region24: #{tpu_custom_call.1} parent=1 // pred_region
      %89 = dma.done [#allocation5], 16
    $region25: #{tpu_custom_call.1} parent=1 // pred_fallthru
      _
    %90 = vsyncpa [#allocation4], 1
    %91 = vsyncpa [#allocation5], 1

</llo_original>
